<compile_context>
chip_gen: v6e
topology: v6e:2x2x1
jax: 0.10.0
libtpu: 0.0.40
codegen_flags: <defaults>
</compile_context>

<pallas_src>
import functools

import jax
import jax.numpy as jnp
from jax import lax
from jax.experimental import pallas as pl
from jax.experimental.pallas import tpu as pltpu


def _round_up(x: int, m: int) -> int:
    return ((x + m - 1) // m) * m


def _categorical_kernel(x_ref, w_ref, b_ref, out_ref, *, lse_col):
    x = x_ref[...]          # [TB, K]     (true K; input loads tolerate non-128 widths)
    w = w_ref[...]          # [K, N_pad]  resident across the batch grid
    b = b_ref[...]          # [1, N_pad]  padded columns hold -1e30

    # Linear layer on the MXU, f32 accumulation.
    logits = jnp.dot(x, w, preferred_element_type=jnp.float32) + b

    # Numerically stable log-softmax; exp(shifted) computed once and reused for the sum.
    m = jnp.max(logits, axis=-1, keepdims=True)
    shifted = logits - m
    p = jnp.exp(shifted)
    log_z = jnp.log(jnp.sum(p, axis=-1, keepdims=True))

    logp = shifted - log_z          # normalized logits = Categorical's canonical parameter
    lse = m + log_z                 # raw logits = log_probs + lse

    # Fold lse into the first padded column: one full-width, lane-dense store and no
    # separate (TB, 1) masked output.
    col = lax.broadcasted_iota(jnp.int32, logp.shape, 1)
    out_ref[...] = jnp.where(col == lse_col, lse, logp).astype(out_ref.dtype)


def init_categorical_params(key, num_inputs, num_outputs, gain=0.01):
    """Mirrors the module init: orthogonal(gain=0.01) weight, zero bias."""
    # nn.Linear weight is (out, in); orthogonal init applied there with gain 0.01.
    w = jax.nn.initializers.orthogonal(scale=gain)(key, (num_outputs, num_inputs), jnp.float32)
    weight_t = jnp.transpose(w)                       # store as [in, out] for the kernel
    bias = jnp.zeros((1, num_outputs), jnp.float32)   # constant_(0)
    return weight_t, bias


def pad_categorical_params(weight_t, bias):
    """One-time lane-dense padding of the static params (hoisted out of the forward path).

    N_pad = round_up(N + 1, 128) guarantees at least one padded column, which the kernel
    reuses to carry the per-row logsumexp.  Padded bias columns are -1e30 so their
    exp() underflows to exactly 0 and they never affect the softmax.
    """
    K, N = weight_t.shape
    N_pad = _round_up(N + 1, 128)
    w_p = jnp.zeros((K, N_pad), jnp.float32).at[:, :N].set(weight_t)
    b_p = jnp.full((1, N_pad), -1e30, jnp.float32).at[:, :N].set(bias.reshape(1, N))
    return w_p, b_p


@functools.partial(
    jax.jit,
    static_argnames=("num_outputs", "block_batch", "out_dtype", "weight_buffer_count"),
)
def categorical_forward(x, w_padded, b_padded, *, num_outputs, block_batch=512,
                        out_dtype=jnp.float32, weight_buffer_count=None):
    """Fused linear + Categorical(logits=...) canonicalization.

    Args:
      x:         [B, K] float32 activations (K need NOT be a multiple of 128).
      w_padded:  [K, N_pad] pre-padded transposed weight (from pad_categorical_params).
      b_padded:  [1, N_pad] pre-padded bias (padded cols = -1e30).
      num_outputs: true action-space size N (static).
      block_batch: target batch tile; raise to 1024-2048 on v6e/v5e small-K configs.
      out_dtype: jnp.float32 (default) or jnp.bfloat16 to halve output HBM traffic.
      weight_buffer_count: set to 1 on v7x (64 MiB VMEM) with very large K to
        single-buffer the grid-invariant weight/bias.
    Returns:
      [B_pad, N_pad] array: cols [0, N) = log_probs, col N = logsumexp,
      cols (N, N_pad) = ~-1e30 padding (exp() == 0).  No slicing is done here; keep the
      padded layout downstream and slice only if/where actually required.
    """
    B, K = x.shape
    K2, N_pad = w_padded.shape
    assert K == K2 and b_padded.shape == (1, N_pad) and num_outputs < N_pad

    # Balanced batch tiling: last-tile padding is at most 7 rows, and the parallel grid
    # gets >= 2 steps when the batch allows (v7x has 2 TensorCores sharding this axis).
    num_tiles = max(1, -(-B // block_batch))
    if num_tiles < 2 and B >= 16:
        num_tiles = 2
    TB = _round_up(-(-B // num_tiles), 8)
    B_pad = _round_up(B, TB)
    if B_pad != B:                      # only pad the batch dim, and only when needed
        x = jnp.pad(x, ((0, B_pad - B), (0, 0)))
    grid = (B_pad // TB,)

    resident = {}
    if weight_buffer_count is not None:
        resident["pipeline_mode"] = pl.Buffered(weight_buffer_count)

    kernel = functools.partial(_categorical_kernel, lse_col=num_outputs)
    out = pl.pallas_call(
        kernel,
        out_shape=jax.ShapeDtypeStruct((B_pad, N_pad), out_dtype),
        grid=grid,
        in_specs=[
            pl.BlockSpec((TB, K), lambda i: (i, 0)),                    # batch-tiled x
            pl.BlockSpec((K, N_pad), lambda i: (0, 0), **resident),     # resident weight
            pl.BlockSpec((1, N_pad), lambda i: (0, 0), **resident),     # resident bias
        ],
        out_specs=pl.BlockSpec((TB, N_pad), lambda i: (i, 0)),
        compiler_params=pltpu.CompilerParams(
            dimension_semantics=("parallel",),
            vmem_limit_bytes=64 * 1024 * 1024,   # > v5e's 16 MiB / v6e-v7x's 32 MiB default
        ),
    )(x, w_padded, b_padded)
    return out


if __name__ == "__main__":
    num_inputs, num_outputs, batch = 32, 16, 8

    key = jax.random.PRNGKey(0)
    k_w, k_x = jax.random.split(key)
    weight_t, bias = init_categorical_params(k_w, num_inputs, num_outputs)
    w_p, b_p = pad_categorical_params(weight_t, bias)          # once, at init time
    x = jax.random.normal(k_x, (batch, num_inputs), jnp.float32)

    out = categorical_forward(x, w_p, b_p, num_outputs=num_outputs)
    jax.block_until_ready(out)

    # Test-only slices / reconstructions (the hot path returns the padded slab untouched).
    log_probs = out[:batch, :num_outputs]
    lse = out[:batch, num_outputs:num_outputs + 1]
    probs = jnp.exp(log_probs)
    raw_logits = log_probs + lse

    ref_logits = jnp.dot(x, weight_t) + bias
    assert jnp.allclose(jnp.sum(probs, axis=-1), 1.0, atol=1e-5)
    assert jnp.allclose(log_probs, jax.nn.log_softmax(ref_logits, axis=-1), atol=1e-5)
    assert jnp.allclose(raw_logits, ref_logits, atol=1e-5)

    print("KERNEL_OK")
</pallas_src>

<mosaic_0001>
module attributes {stable_mosaic.version = 11 : i64} {
  func.func @_categorical_kernel(%arg0: i32, %arg1: memref<8x32xf32, #tpu.memory_space<vmem>>, %arg2: memref<32x128xf32, #tpu.memory_space<vmem>>, %arg3: memref<1x128xf32, #tpu.memory_space<vmem>>, %arg4: memref<8x128xf32, #tpu.memory_space<vmem>>) attributes {dimension_semantics = [#tpu.dimension_semantics<parallel>], iteration_bounds = array<i64: 1>, scalar_prefetch = 0 : i64, scratch_operands = 0 : i64, tpu.core_type = #tpu.core_type<tc>, window_params = [{transform_indices = @transform_0, window_bounds = array<i64: 8, 32>}, {pipeline_mode = #tpu.pipeline_mode<synchronous>, transform_indices = @transform_1, window_bounds = array<i64: 32, 128>}, {pipeline_mode = #tpu.pipeline_mode<synchronous>, transform_indices = @transform_2, window_bounds = array<i64: 1, 128>}, {transform_indices = @transform_3, window_bounds = array<i64: 8, 128>}]} {
    %c0 = arith.constant 0 : index
    %c0_0 = arith.constant 0 : index
    %0 = vector.load %arg1[%c0, %c0_0] : memref<8x32xf32, #tpu.memory_space<vmem>>, vector<8x32xf32>
    %c0_1 = arith.constant 0 : index
    %c0_2 = arith.constant 0 : index
    %1 = vector.load %arg2[%c0_1, %c0_2] : memref<32x128xf32, #tpu.memory_space<vmem>>, vector<32x128xf32>
    %c0_3 = arith.constant 0 : index
    %c0_4 = arith.constant 0 : index
    %2 = vector.load %arg3[%c0_3, %c0_4] : memref<1x128xf32, #tpu.memory_space<vmem>>, vector<1x128xf32>
    %cst = arith.constant dense<0.000000e+00> : vector<8x128xf32>
    %3 = tpu.matmul %0, %1, %cst {dimension_numbers = #tpu.dot_dimension_numbers<[1], [0], [0], [1], [0, 0, 1, 1], [], []>} : vector<8x32xf32>, vector<32x128xf32>, vector<8x128xf32> -> vector<8x128xf32>
    %4 = vector.broadcast %2 : vector<1x128xf32> to vector<8x128xf32>
    %5 = arith.addf %3, %4 : vector<8x128xf32>
    %cst_5 = arith.constant dense<0xFF800000> : vector<8xf32>
    %6 = vector.multi_reduction <maximumf>, %5, %cst_5 [1] : vector<8x128xf32> to vector<8xf32>
    %7 = vector.shape_cast %6 : vector<8xf32> to vector<8x1xf32>
    %8 = vector.broadcast %7 : vector<8x1xf32> to vector<8x128xf32>
    %9 = arith.subf %5, %8 : vector<8x128xf32>
    %10 = math.exp %9 : vector<8x128xf32>
    %cst_6 = arith.constant dense<0.000000e+00> : vector<8xf32>
    %11 = vector.multi_reduction <add>, %10, %cst_6 [1] : vector<8x128xf32> to vector<8xf32>
    %12 = vector.shape_cast %11 : vector<8xf32> to vector<8x1xf32>
    %13 = math.log %12 : vector<8x1xf32>
    %14 = vector.broadcast %13 : vector<8x1xf32> to vector<8x128xf32>
    %15 = arith.subf %9, %14 : vector<8x128xf32>
    %16 = arith.addf %7, %13 : vector<8x1xf32>
    %17 = tpu.iota {dimensions = array<i32: 1>} : vector<8x128xi32>
    %c16_i32 = arith.constant 16 : i32
    %18 = vector.broadcast %c16_i32 : i32 to vector<8x128xi32>
    %19 = arith.cmpi eq, %17, %18 : vector<8x128xi32>
    %20 = vector.shape_cast %16 : vector<8x1xf32> to vector<8x1xf32>
    %21 = vector.broadcast %20 : vector<8x1xf32> to vector<8x128xf32>
    %22 = arith.select %19, %21, %15 : vector<8x128xi1>, vector<8x128xf32>
    %c0_7 = arith.constant 0 : index
    %c0_8 = arith.constant 0 : index
    %23 = vector.load %arg4[%c0_7, %c0_8] : memref<8x128xf32, #tpu.memory_space<vmem>>, vector<8x128xf32>
    tpu.vector_store %arg4[%c0_7, %c0_8], %22 {strides = array<i32>} : memref<8x128xf32, #tpu.memory_space<vmem>>, vector<8x128xf32>,
    return
  }
  func.func @transform_0(%arg0: i32) -> (i32, i32) {
    %c0_i32 = arith.constant 0 : i32
    %c0_i32_0 = arith.constant 0 : i32
    return %arg0, %c0_i32 : i32, i32
  }
  func.func @transform_1(%arg0: i32) -> (i32, i32) {
    %c0_i32 = arith.constant 0 : i32
    %c0_i32_0 = arith.constant 0 : i32
    %c0_i32_1 = arith.constant 0 : i32
    return %c0_i32, %c0_i32_0 : i32, i32
  }
  func.func @transform_2(%arg0: i32) -> (i32, i32) {
    %c0_i32 = arith.constant 0 : i32
    %c0_i32_0 = arith.constant 0 : i32
    %c0_i32_1 = arith.constant 0 : i32
    return %c0_i32, %c0_i32_0 : i32, i32
  }
  func.func @transform_3(%arg0: i32) -> (i32, i32) {
    %c0_i32 = arith.constant 0 : i32
    %c0_i32_0 = arith.constant 0 : i32
    return %arg0, %c0_i32 : i32, i32
  }
}

</mosaic_0001>

<llo_original>
// kernel: categorical_forward.1
$region0: #{categorical_forward.1}
  #allocation0 [shape = 'u32[]', space=smem, size = 0x4, offset = 0x4, fixed_abs, tag = 'smem constant byte address 0x4 - core index']
  #allocation1 [shape = 'u32[144,128]{1,0:T(1,128)}', space=vmem, size = 0x12000, scoped, tag = 'internal scratch']
  %s0 = inlined_call_operand.hbm [shape: f32[8,32], index: 0, kind: input, shape index: {}]
  %s1 = inlined_call_operand.hbm [shape: f32[32,128], index: 1, kind: input, shape index: {}]
  %s2 = inlined_call_operand.vmem [shape: f32[1,128], index: 2, kind: input, shape index: {}]
  %s3 = inlined_call_operand.hbm [shape: f32[8,128], index: 3, kind: output, shape index: {}]
  %s4 = sld [smem:[#allocation0]]
  $region30: #{categorical_forward.1} parent=0
    _
  %s6 = ssub.s32 1, %s4
  %s7 = scalar_select 0, %s6, %s4
  $region1: #{categorical_forward.1} parent=0
    #allocation2 [shape = 'u8[4096]{0}', space=vmem, size = 0x1000, scoped, tag = 'input window, operand 0, single buffered']
    #allocation3 [shape = 's32[1]{0}', space=sflag, size = 0x4, scoped, tag = 'scoped memory for categorical_forward.1']
    #allocation4 [shape = 's32[1]{0}', space=sflag, size = 0x4, scoped, tag = 'scoped memory for categorical_forward.1']
    #allocation5 [shape = 'u8[16384]{0}', space=vmem, size = 0x4000, scoped, tag = 'input window, operand 1, single buffered']
    #allocation6 [shape = 's32[1]{0}', space=sflag, size = 0x4, scoped, tag = 'scoped memory for categorical_forward.1']
    #allocation7 [shape = 'u8[4096]{0}', space=vmem, size = 0x1000, scoped, tag = 'output window, operand 0, single buffered']
    %8 = vsyncpa [#allocation3], 0
    %9 = vsyncpa [#allocation6], 0
    %10 = vsyncpa [#allocation4], 0
    // Predicated region
    $region2: #{categorical_forward.1} parent=1 // pred_check
      _
    $region3: #{categorical_forward.1} parent=1 // pred_check_branch
      %12 = sbr.rel (0) target = $region5
    $region4: #{categorical_forward.1} parent=1 // pred_region
      %s14 = ssub.s32 128, 128
      %15 = vsyncadd [#allocation3], %s14
      %s17 = sshll.u32 [#allocation2], 4
      %s18 = int_to_ptr.vmem [resolvable:$true] %s17
      %20 = dma.hbm_to_vmem [thread:$0]  %s0, 128, %s18, [#allocation3]
    $region5: #{categorical_forward.1} parent=1 // pred_fallthru
      _
    // Predicated region
    $region6: #{categorical_forward.1} parent=1 // pred_check
      _
    $region7: #{categorical_forward.1} parent=1 // pred_check_branch
      %22 = sbr.rel (0) target = $region9
    $region8: #{categorical_forward.1} parent=1 // pred_region
      %s24 = ssub.s32 512, 512
      %25 = vsyncadd [#allocation6], %s24
      %s26 = sshll.u32 [#allocation5], 4
      %s27 = int_to_ptr.vmem [resolvable:$true] %s26
      %32 = dma.hbm_to_vmem [thread:$0]  %s1, 512, %s27, [#allocation6], 128, 128, 8
    $region9: #{categorical_forward.1} parent=1 // pred_fallthru
      _
    // Predicated region
    $region10: #{categorical_forward.1} parent=1 // pred_check
      _
    $region11: #{categorical_forward.1} parent=1 // pred_check_branch
      %34 = sbr.rel (0) target = $region13
    $region12: #{categorical_forward.1} parent=1 // pred_region
      _
    $region13: #{categorical_forward.1} parent=1 // pred_fallthru
      _
    // Predicated region
    $region14: #{categorical_forward.1} parent=1 // pred_check
      _
    $region15: #{categorical_forward.1} parent=1 // pred_check_branch
      %36 = sbr.rel (0) target = $region17
    $region16: #{categorical_forward.1} parent=1 // pred_region
      %37 = dma.done [#allocation3], 128
    $region17: #{categorical_forward.1} parent=1 // pred_fallthru
      _
    // Predicated region
    $region18: #{categorical_forward.1} parent=1 // pred_check
      _
    $region19: #{categorical_forward.1} parent=1 // pred_check_branch
      %39 = sbr.rel (0) target = $region21
    $region20: #{categorical_forward.1} parent=1 // pred_region
      %40 = dma.done [#allocation6], 512
    $region21: #{categorical_forward.1} parent=1 // pred_fallthru
      _
    %v41 = vld [vmem:[#allocation2] sm:$0xff]
    %v42 = vld [vmem:[#allocation5] sm:$0xff]
    %v43 = vld [vmem:[#allocation5 + $0x8] sm:$0xff]
    %v44 = vld [vmem:[#allocation5 + $0x10] sm:$0xff]
    %v45 = vld [vmem:[#allocation5 + $0x18] sm:$0xff]
    %v46 = vld [vmem:[%s2] sm:$0x1]
    %v48 = vlaneseq
    %v49 = vshrl.u32 %v48, 7
    %v50 = vsub.s32 0, %v49
    %v51 = vrot.slane %v46, %v50
    %vm53 = vcmask 261120
    %v55 = vsel %vm53, %v41, 0
    %57 = vmatprep.subr.mxu0 0.0
    %58 = vmatpush1.msra.mxu0 0.0
    %59 = vmatprep.subr.mxu0 0.0
    %60 = vmatpush1.msra.mxu0 0.0
    %61 = vmatprep.subr.mxu0 0.0
    %62 = vmatpush1.msra.mxu0 0.0
    %63 = vmatprep.subr.mxu0 0.0
    %64 = vmatpush1.msra.mxu0 0.0
    %65 = vmatprep.subr.mxu0 0.0
    %66 = vmatpush1.msra.mxu0 0.0
    %67 = vmatprep.subr.mxu0 0.0
    %68 = vmatpush1.msra.mxu0 0.0
    %69 = vmatprep.subr.mxu0 0.0
    %70 = vmatpush1.msra.mxu0 0.0
    %71 = vmatprep.subr.mxu0 0.0
    %72 = vmatpush1.msra.mxu0 0.0
    %73 = vmatprep.subr.mxu0 0.0
    %74 = vmatpush1.msra.mxu0 0.0
    %75 = vmatprep.subr.mxu0 0.0
    %76 = vmatpush1.msra.mxu0 0.0
    %77 = vmatprep.subr.mxu0 0.0
    %78 = vmatpush1.msra.mxu0 0.0
    %79 = vmatprep.subr.mxu0 0.0
    %80 = vmatpush1.msra.mxu0 0.0
    %81 = vmatprep.subr.mxu0 0.0
    %82 = vmatpush1.msra.mxu0 %v45
    %83 = vmatprep.subr.mxu0 0.0
    %84 = vmatpush1.msra.mxu0 %v44
    %85 = vmatprep.subr.mxu0 0.0
    %86 = vmatpush1.msra.mxu0 %v43
    %87 = vmatprep.subr.mxu0 0.0
    %88 = vmatpush1.msra.mxu0 %v42
    %89 = vmatprep.subr.mxu0 0.0
    %90 = vmatpush2.msra.mxu0 0.0
    %91 = vmatprep.subr.mxu0 0.0
    %92 = vmatpush2.msra.mxu0 0.0
    %93 = vmatprep.subr.mxu0 0.0
    %94 = vmatpush2.msra.mxu0 0.0
    %95 = vmatprep.subr.mxu0 0.0
    %96 = vmatpush2.msra.mxu0 0.0
    %97 = vmatprep.subr.mxu0 0.0
    %98 = vmatpush2.msra.mxu0 0.0
    %99 = vmatprep.subr.mxu0 0.0
    %100 = vmatpush2.msra.mxu0 0.0
    %101 = vmatprep.subr.mxu0 0.0
    %102 = vmatpush2.msra.mxu0 0.0
    %103 = vmatprep.subr.mxu0 0.0
    %104 = vmatpush2.msra.mxu0 0.0
    %105 = vmatprep.subr.mxu0 0.0
    %106 = vmatpush2.msra.mxu0 0.0
    %107 = vmatprep.subr.mxu0 0.0
    %108 = vmatpush2.msra.mxu0 0.0
    %109 = vmatprep.subr.mxu0 0.0
    %110 = vmatpush2.msra.mxu0 0.0
    %111 = vmatprep.subr.mxu0 0.0
    %112 = vmatpush2.msra.mxu0 0.0
    %113 = vmatprep.subr.mxu0 0.0
    %114 = vmatpush2.msra.mxu0 0.0
    %115 = vmatprep.subr.mxu0 0.0
    %116 = vmatpush2.msra.mxu0 0.0
    %117 = vmatprep.subr.mxu0 0.0
    %118 = vmatpush2.msra.mxu0 0.0
    %119 = vmatprep.subr.mxu0 0.0
    %120 = vmatpush2.msra.mxu0 0.0
    %121 = vmatprep.mubr.f32.mxu0 0.0
    %122 = vmatmul.mubr.f32.gmra.mxu0 %v55
    %v123 = vpop.f32.mrf.mxu0
    %v124 = vadd.f32 %v51, %v123
    %v125 = vpop.f32.mrf.mxu0
    %126 = vdwg.mxu0
    %127 = vmax.xlane.f32.xlu0 %v124
    %v128 = vpop.xlane.xlu0 %127
    %v129 = vsub.f32 %v124, %v128
    %v130 = vmul.f32 %v129, 1.442695
    %v131 = vpow.pop %v130
    %132 = vadd.xlane.f32.xlu0 %v131
    %v133 = vpop.xlane.xlu0 %132
    %v134 = vlog2.pop %v133
    %v135 = vmul.f32 %v134, 0.6931472
    %v136 = vsub.f32 %v129, %v135
    %v137 = vadd.f32 %v128, %v135
    %v138 = vlaneseq
    %v139 = vand.u32 %v138, 127
    %vm140 = vcmp.eq.s32.totalorder %v139, 16
    %v141 = vsel %vm140, %v137, %v136
    %142 = vst [vmem:[#allocation7] sm:$0xff] %v141
    // Predicated region
    $region22: #{categorical_forward.1} parent=1 // pred_check
      _
    $region23: #{categorical_forward.1} parent=1 // pred_check_branch
      %144 = sbr.rel (0) target = $region25
    $region24: #{categorical_forward.1} parent=1 // pred_region
      %s146 = ssub.s32 128, 128
      %147 = vsyncadd [#allocation4], %s146
      %s149 = sshll.u32 [#allocation7], 4
      %s150 = int_to_ptr.vmem [resolvable:$true] %s149
      %152 = dma.vmem_to_hbm [thread:$0]  %s150, 128, %s3, [#allocation4]
    $region25: #{categorical_forward.1} parent=1 // pred_fallthru
      _
    // Predicated region
    $region26: #{categorical_forward.1} parent=1 // pred_check
      _
    $region27: #{categorical_forward.1} parent=1 // pred_check_branch
      %154 = sbr.rel (0) target = $region29
    $region28: #{categorical_forward.1} parent=1 // pred_region
      %155 = dma.done [#allocation4], 128
    $region29: #{categorical_forward.1} parent=1 // pred_fallthru
      _
    %156 = vsyncpa [#allocation3], 1
    %157 = vsyncpa [#allocation6], 1
    %158 = vsyncpa [#allocation4], 1

</llo_original>
